<compile_context>
chip_gen: v7x
topology: tpu7x:2x2x1
jax: 0.10.0
libtpu: 0.0.40
codegen_flags: <defaults>
</compile_context>

<pallas_src>
import functools

import numpy as np
import jax
import jax.numpy as jnp
from jax import lax
from jax.experimental import pallas as pl
from jax.experimental.pallas import tpu as pltpu


# ----------------------------------------------------------------------------
# Helpers
# ----------------------------------------------------------------------------
def _calc_same_pad(seq_len, ksize, stride):
    # Mirrors SameConv1d._calc_same_pad
    if seq_len % stride == 0:
        return max(ksize - stride, 0)
    return max(ksize - seq_len % stride, 0)


def _round_up(v, m):
    return -(-v // m) * m


def _vmem_capacity_bytes():
    try:
        return int(pltpu.get_tpu_info().vmem_capacity_bytes)
    except Exception:
        return 64 * 1024 * 1024   # conservative (v7x per-TC physical VMEM)


def _pick_tile_l(c_in, c_out, ksize, in_item, out_item, halo_pad, budget_bytes,
                 use_im2col):
    """Largest TILE_L (multiple of halo_pad, <= 8192) whose blocks fit the budget."""
    cin8 = _round_up(c_in, 8)
    cout8 = _round_up(c_out, 8)
    best = halo_pad
    for t in (128, 256, 512, 1024, 2048, 4096, 8192):
        if t % halo_pad:
            continue
        body = cin8 * t * in_item * 2                                # x body  (dbl-buf)
        halo = cin8 * halo_pad * in_item * 2                         # x halo  (dbl-buf)
        mbody = 8 * t * in_item * 2                                  # mask body
        mhalo = 8 * halo_pad * in_item * 2                           # mask halo
        w = cout8 * _round_up(ksize * c_in, 128) * in_item * 2       # weight (counted x2)
        outb = cout8 * t * out_item * 2                              # output block
        xbuf = cin8 * (t + halo_pad) * in_item                       # staging scratch
        staged = (_round_up(ksize * c_in, 8) * t * in_item) if use_im2col else 0
        res = cout8 * t * 4                                          # f32 result value
        if body + halo + mbody + mhalo + w + outb + xbuf + staged + res <= budget_bytes:
            best = t
    return best


# ----------------------------------------------------------------------------
# Pallas kernel: one (batch, L-tile) grid step of the masked "same" conv.
#   xb_ref : (1, Cin, TILE)        body of the padded input window (NCL)
#   xh_ref : (1, Cin, HALO_PAD)    halo (next 128 lanes) of the window
#   mb_ref : (1, 1,   TILE)        mask body   (optional)
#   mh_ref : (1, 1,   HALO_PAD)    mask halo   (optional)
#   w_ref  : (Cout, K*Cin)         im2col-major weights
#   b_ref  : (Cout, 1)             bias        (optional)
#   o_ref  : (1, Cout, TILE)       output tile (lane-dense NCL)
#   xbuf   : (Cin, TILE+HALO_PAD)  VMEM staging of the masked halo'd window
#   staged : (K*Cin, TILE)         VMEM im2col buffer (only if use_im2col)
# ----------------------------------------------------------------------------
def _masked_conv1d_kernel(*refs, ksize, c_in, tile, has_mask, has_bias, use_im2col):
    it = iter(refs)
    xb_ref = next(it)
    xh_ref = next(it)
    mb_ref = next(it) if has_mask else None
    mh_ref = next(it) if has_mask else None
    w_ref = next(it)
    b_ref = next(it) if has_bias else None
    o_ref = next(it)
    xbuf_ref = next(it)
    staged_ref = next(it) if use_im2col else None

    # Stage the masked, halo'd window once (aligned stores; mask = VPU select
    # fused into the copy).
    xb = xb_ref[0]                          # (Cin, TILE)
    xh = xh_ref[0]                          # (Cin, HALO_PAD)
    if has_mask:
        xb = jnp.where(mb_ref[0] != 0, xb, jnp.zeros_like(xb))
        xh = jnp.where(mh_ref[0] != 0, xh, jnp.zeros_like(xh))
    xbuf_ref[:, :tile] = xb
    xbuf_ref[:, tile:] = xh

    if use_im2col:
        # Hoist the K lane-shifted views into one im2col buffer, then a single
        # MXU dot with contraction K*Cin (instead of K shallow Cin-deep dots).
        for k in range(ksize):
            staged_ref[k * c_in:(k + 1) * c_in, :] = xbuf_ref[:, k:k + tile]
        acc = jnp.dot(w_ref[...], staged_ref[...],
                      preferred_element_type=jnp.float32)          # (Cout, TILE) f32
    else:
        # Large-Cin fallback: per-tap dots with VALUE (register) accumulation.
        c_out = o_ref.shape[1]
        acc = jnp.zeros((c_out, tile), jnp.float32)
        for k in range(ksize):
            acc = acc + jnp.dot(w_ref[:, k * c_in:(k + 1) * c_in],
                                xbuf_ref[:, k:k + tile],
                                preferred_element_type=jnp.float32)

    if has_bias:
        acc = acc + b_ref[...]              # (Cout, 1) broadcast over lanes
    o_ref[0] = acc.astype(o_ref.dtype)


# ----------------------------------------------------------------------------
# Public wrapper: same semantics as MaskedConv1d.forward(x, mask) -> (y, mask)
# ----------------------------------------------------------------------------
def masked_conv1d(x, mask, weight, bias=None, *, stride=1, dilation=1, groups=1,
                  compute_dtype=None, tile_l=None):
    """Forward pass of MaskedConv1d.

    Args:
      x:      (N, Cin, L) float (PyTorch NCL layout)
      mask:   (N, L) bool or None
      weight: (Cout, Cin // groups, K)
      bias:   (Cout,) or None
      compute_dtype: optional DMA/compute dtype (e.g. jnp.bfloat16) -- halves
        HBM/VMEM traffic on all generations; accumulation stays f32 and the
        output keeps x.dtype.
      tile_l: optional sequence tile size override (rounded to 128).
    Returns:
      (y, mask) with y of shape (N, Cout, L) -- same as the torch module.
    """
    if dilation != 1:
        raise ValueError("dilation != 1 is currently not supported!")
    if groups != 1:
        raise NotImplementedError  # TODO(synk): grouped conv not implemented in the Pallas kernel
    if stride != 1:
        raise NotImplementedError  # TODO(synk): stride > 1 path (strided taps + mask[:, ::stride])

    n, c_in, seq_len = x.shape
    c_out, _, ksize = weight.shape
    out_dtype = x.dtype
    cdt = np.dtype(compute_dtype) if compute_dtype is not None else np.dtype(x.dtype)

    pad = _calc_same_pad(seq_len, ksize, stride)
    pad_l = pad // 2
    out_len = seq_len                      # stride == 1 "same" conv
    halo = ksize - 1
    halo_pad = max(128, _round_up(halo, 128))
    use_im2col = c_in < 128

    # ----- generation-aware VMEM budget + tile selection ---------------------
    capacity = _vmem_capacity_bytes()
    budget = capacity // 2
    vmem_limit = min((capacity * 3) // 4, 96 * 1024 * 1024)

    in_item = cdt.itemsize
    out_item = np.dtype(out_dtype).itemsize
    if tile_l is not None:
        tile = max(halo_pad, (int(tile_l) // halo_pad) * halo_pad)
    else:
        tile = _pick_tile_l(c_in, c_out, ksize, in_item, out_item, halo_pad,
                            budget, use_im2col)
    tile = min(tile, _round_up(out_len, halo_pad))
    num_tiles = -(-out_len // tile)
    th = tile // halo_pad
    padded_len = num_tiles * tile + halo_pad   # all input blocks fully in-bounds

    # ----- wrapper glue: ONE fused cast+pad pass over x (mask applied in-kernel)
    x_pad = jnp.pad(x.astype(cdt),
                    ((0, 0), (0, 0), (pad_l, padded_len - pad_l - seq_len)))
    has_mask = mask is not None
    if has_mask:
        m_pad = jnp.pad(mask.astype(cdt)[:, None, :],
                        ((0, 0), (0, 0), (pad_l, padded_len - pad_l - seq_len)))

    # im2col-major weights: Wmat[co, k*Cin + ci] = weight[co, ci, k]
    wmat = jnp.transpose(weight, (0, 2, 1)).reshape(c_out, ksize * c_in).astype(cdt)
    has_bias = bias is not None

    # ----- grid: larger-extent axis first so megacore sharding has work ------
    if n >= num_tiles:
        grid = (n, num_tiles)
        def _bj(a0, a1):
            return a0, a1
    else:
        grid = (num_tiles, n)
        def _bj(a0, a1):
            return a1, a0

    def _body_map(a0, a1):
        b, j = _bj(a0, a1)
        return (b, 0, j)

    def _halo_map(a0, a1):
        b, j = _bj(a0, a1)
        return (b, 0, (j + 1) * th)

    def _const_map(a0, a1):
        return (0, 0)

    def _out_map(a0, a1):
        b, j = _bj(a0, a1)
        return (b, 0, j)

    in_specs = [
        pl.BlockSpec((1, c_in, tile), _body_map),
        pl.BlockSpec((1, c_in, halo_pad), _halo_map),
    ]
    args = [x_pad, x_pad]
    if has_mask:
        in_specs += [pl.BlockSpec((1, 1, tile), _body_map),
                     pl.BlockSpec((1, 1, halo_pad), _halo_map)]
        args += [m_pad, m_pad]
    # TODO(synk): single-buffer this constant weight block (pipeline_mode=pl.Buffered(1))
    # once confirmed supported; the VMEM picker already accounts for 2 copies.
    in_specs.append(pl.BlockSpec((c_out, ksize * c_in), _const_map))
    args.append(wmat)
    if has_bias:
        in_specs.append(pl.BlockSpec((c_out, 1), _const_map))
        args.append(bias.astype(jnp.float32).reshape(c_out, 1))

    scratch = [pltpu.VMEM((c_in, tile + halo_pad), cdt)]
    if use_im2col:
        scratch.append(pltpu.VMEM((ksize * c_in, tile), cdt))

    kernel = functools.partial(
        _masked_conv1d_kernel, ksize=ksize, c_in=c_in, tile=tile,
        has_mask=has_mask, has_bias=has_bias, use_im2col=use_im2col)

    y = pl.pallas_call(
        kernel,
        out_shape=jax.ShapeDtypeStruct((n, c_out, out_len), out_dtype),
        grid_spec=pltpu.PrefetchScalarGridSpec(
            num_scalar_prefetch=0,
            grid=grid,
            in_specs=in_specs,
            out_specs=pl.BlockSpec((1, c_out, tile), _out_map),
            scratch_shapes=scratch,
        ),
        compiler_params=pltpu.CompilerParams(
            dimension_semantics=("parallel", "parallel"),
            vmem_limit_bytes=vmem_limit,
        ),
    )(*args)

    # _compute_mask: with stride == 1 the mask is returned unchanged.
    return y, mask


# ----------------------------------------------------------------------------
# Pure-JAX reference (for self-check) using lax.conv_general_dilated.
# ----------------------------------------------------------------------------
def _reference(x, mask, weight, bias=None, stride=1):
    xm = jnp.where(mask[:, None, :], x, 0.0) if mask is not None else x
    seq_len = x.shape[-1]
    ksize = weight.shape[-1]
    pad = _calc_same_pad(seq_len, ksize, stride)
    y = lax.conv_general_dilated(
        xm, weight,
        window_strides=(stride,),
        padding=[(pad // 2, pad - pad // 2)],
        dimension_numbers=("NCH", "OIH", "NCH"),
    )
    if bias is not None:
        y = y + bias[None, :, None]
    return y


if __name__ == "__main__":
    key = jax.random.PRNGKey(0)
    k_x, k_m, k_w, k_b, k_x2, k_m2 = jax.random.split(key, 6)

    N, C_IN, C_OUT, L, K = 2, 4, 8, 16, 17  # MaskedConv1d defaults: kernel_size=17, bias=False

    x = jax.random.normal(k_x, (N, C_IN, L), dtype=jnp.float32)
    mask = jax.random.bernoulli(k_m, p=0.7, shape=(N, L))

    bound = 1.0 / float(np.sqrt(C_IN * K))
    weight = jax.random.uniform(k_w, (C_OUT, C_IN, K), jnp.float32, -bound, bound)

    # --- Test 1: module defaults (bias=False), single (partial) tile ---------
    y, mask_out = masked_conv1d(x, mask, weight, bias=None, stride=1, groups=1)
    y = jax.block_until_ready(y)
    y_ref = _reference(x, mask, weight)
    assert y.shape == (N, C_OUT, L)
    assert mask_out is mask
    assert jnp.allclose(y, y_ref, atol=1e-4, rtol=1e-4)

    # --- Test 2: multi-tile halo path + fused bias, forced small tile,
    #             ragged last tile written directly (no trailing slice) -------
    L2 = 300
    x2 = jax.random.normal(k_x2, (N, C_IN, L2), dtype=jnp.float32)
    mask2 = jax.random.bernoulli(k_m2, p=0.8, shape=(N, L2))
    bias = jax.random.uniform(k_b, (C_OUT,), jnp.float32, -bound, bound)
    y2, _ = masked_conv1d(x2, mask2, weight, bias=bias, tile_l=128)
    y2 = jax.block_until_ready(y2)
    y2_ref = _reference(x2, mask2, weight, bias=bias)
    assert y2.shape == (N, C_OUT, L2)
    assert jnp.allclose(y2, y2_ref, atol=1e-4, rtol=1e-4)

    # --- Test 3: bf16 DMA/compute stream (f32 accumulation), loose tolerance -
    y3, _ = masked_conv1d(x2, mask2, weight, bias=bias,
                          compute_dtype=jnp.bfloat16, tile_l=128)
    y3 = jax.block_until_ready(y3)
    assert y3.dtype == x2.dtype
    assert jnp.allclose(y3, y2_ref, atol=5e-2, rtol=5e-2)

    print("KERNEL_OK")
</pallas_src>

<mosaic_0001>
module attributes {stable_mosaic.version = 11 : i64} {
  func.func @_masked_conv1d_kernel(%arg0: i32, %arg1: i32, %arg2: memref<1x4x128xf32, #tpu.memory_space<vmem>>, %arg3: memref<1x4x128xf32, #tpu.memory_space<vmem>>, %arg4: memref<1x1x128xf32, #tpu.memory_space<vmem>>, %arg5: memref<1x1x128xf32, #tpu.memory_space<vmem>>, %arg6: memref<8x68xf32, #tpu.memory_space<vmem>>, %arg7: memref<1x8x128xf32, #tpu.memory_space<vmem>>, %arg8: memref<4x256xf32, #tpu.memory_space<vmem>>, %arg9: memref<68x128xf32, #tpu.memory_space<vmem>>) attributes {dimension_semantics = [#tpu.dimension_semantics<parallel>, #tpu.dimension_semantics<parallel>], iteration_bounds = array<i64: 2, 1>, scalar_prefetch = 0 : i64, scratch_operands = 2 : i64, tpu.core_type = #tpu.core_type<tc>, window_params = [{transform_indices = @transform_0, window_bounds = array<i64: 1, 4, 128>}, {transform_indices = @transform_1, window_bounds = array<i64: 1, 4, 128>}, {transform_indices = @transform_2, window_bounds = array<i64: 1, 1, 128>}, {transform_indices = @transform_3, window_bounds = array<i64: 1, 1, 128>}, {pipeline_mode = #tpu.pipeline_mode<synchronous>, transform_indices = @transform_4, window_bounds = array<i64: 8, 68>}, {transform_indices = @transform_5, window_bounds = array<i64: 1, 8, 128>}]} {
    %c0 = arith.constant 0 : index
    %c0_0 = arith.constant 0 : index
    %c0_1 = arith.constant 0 : index
    %0 = vector.load %arg2[%c0, %c0_0, %c0_1] : memref<1x4x128xf32, #tpu.memory_space<vmem>>, vector<1x4x128xf32>
    %1 = vector.shape_cast %0 : vector<1x4x128xf32> to vector<4x128xf32>
    %c0_2 = arith.constant 0 : index
    %c0_3 = arith.constant 0 : index
    %c0_4 = arith.constant 0 : index
    %2 = vector.load %arg3[%c0_2, %c0_3, %c0_4] : memref<1x4x128xf32, #tpu.memory_space<vmem>>, vector<1x4x128xf32>
    %3 = vector.shape_cast %2 : vector<1x4x128xf32> to vector<4x128xf32>
    %c0_5 = arith.constant 0 : index
    %c0_6 = arith.constant 0 : index
    %c0_7 = arith.constant 0 : index
    %4 = vector.load %arg4[%c0_5, %c0_6, %c0_7] : memref<1x1x128xf32, #tpu.memory_space<vmem>>, vector<1x1x128xf32>
    %5 = vector.shape_cast %4 : vector<1x1x128xf32> to vector<1x128xf32>
    %cst = arith.constant 0.000000e+00 : f32
    %6 = vector.broadcast %cst : f32 to vector<1x128xf32>
    %7 = arith.cmpf one, %5, %6 : vector<1x128xf32>
    %cst_8 = arith.constant 0.000000e+00 : f32
    %8 = vector.broadcast %cst_8 : f32 to vector<4x128xf32>
    %9 = vector.shape_cast %7 : vector<1x128xi1> to vector<1x128xi1>
    %10 = vector.broadcast %9 : vector<1x128xi1> to vector<4x128xi1>
    %11 = arith.select %10, %1, %8 : vector<4x128xi1>, vector<4x128xf32>
    %c0_9 = arith.constant 0 : index
    %c0_10 = arith.constant 0 : index
    %c0_11 = arith.constant 0 : index
    %12 = vector.load %arg5[%c0_9, %c0_10, %c0_11] : memref<1x1x128xf32, #tpu.memory_space<vmem>>, vector<1x1x128xf32>
    %13 = vector.shape_cast %12 : vector<1x1x128xf32> to vector<1x128xf32>
    %cst_12 = arith.constant 0.000000e+00 : f32
    %14 = vector.broadcast %cst_12 : f32 to vector<1x128xf32>
    %15 = arith.cmpf one, %13, %14 : vector<1x128xf32>
    %cst_13 = arith.constant 0.000000e+00 : f32
    %16 = vector.broadcast %cst_13 : f32 to vector<4x128xf32>
    %17 = vector.shape_cast %15 : vector<1x128xi1> to vector<1x128xi1>
    %18 = vector.broadcast %17 : vector<1x128xi1> to vector<4x128xi1>
    %19 = arith.select %18, %3, %16 : vector<4x128xi1>, vector<4x128xf32>
    %c0_14 = arith.constant 0 : index
    %c0_15 = arith.constant 0 : index
    %20 = vector.load %arg8[%c0_14, %c0_15] : memref<4x256xf32, #tpu.memory_space<vmem>>, vector<4x128xf32>
    tpu.vector_store %arg8[%c0_14, %c0_15], %11 {strides = array<i32>} : memref<4x256xf32, #tpu.memory_space<vmem>>, vector<4x128xf32>,
    %c0_16 = arith.constant 0 : index
    %c128 = arith.constant 128 : index
    %21 = vector.load %arg8[%c0_16, %c128] : memref<4x256xf32, #tpu.memory_space<vmem>>, vector<4x128xf32>
    tpu.vector_store %arg8[%c0_16, %c128], %19 {strides = array<i32>} : memref<4x256xf32, #tpu.memory_space<vmem>>, vector<4x128xf32>,
    %c0_17 = arith.constant 0 : index
    %c0_18 = arith.constant 0 : index
    %22 = vector.load %arg8[%c0_17, %c0_18] : memref<4x256xf32, #tpu.memory_space<vmem>>, vector<4x128xf32>
    %c0_19 = arith.constant 0 : index
    %c0_20 = arith.constant 0 : index
    %23 = vector.load %arg9[%c0_19, %c0_20] : memref<68x128xf32, #tpu.memory_space<vmem>>, vector<4x128xf32>
    tpu.vector_store %arg9[%c0_19, %c0_20], %22 {strides = array<i32>} : memref<68x128xf32, #tpu.memory_space<vmem>>, vector<4x128xf32>,
    %c0_21 = arith.constant 0 : index
    %c1 = arith.constant 1 : index
    %24 = vector.load %arg8[%c0_21, %c1] : memref<4x256xf32, #tpu.memory_space<vmem>>, vector<4x128xf32>
    %c4 = arith.constant 4 : index
    %c0_22 = arith.constant 0 : index
    %25 = vector.load %arg9[%c4, %c0_22] : memref<68x128xf32, #tpu.memory_space<vmem>>, vector<4x128xf32>
    tpu.vector_store %arg9[%c4, %c0_22], %24 {strides = array<i32>} : memref<68x128xf32, #tpu.memory_space<vmem>>, vector<4x128xf32>,
    %c0_23 = arith.constant 0 : index
    %c2 = arith.constant 2 : index
    %26 = vector.load %arg8[%c0_23, %c2] : memref<4x256xf32, #tpu.memory_space<vmem>>, vector<4x128xf32>
    %c8 = arith.constant 8 : index
    %c0_24 = arith.constant 0 : index
    %27 = vector.load %arg9[%c8, %c0_24] : memref<68x128xf32, #tpu.memory_space<vmem>>, vector<4x128xf32>
    tpu.vector_store %arg9[%c8, %c0_24], %26 {strides = array<i32>} : memref<68x128xf32, #tpu.memory_space<vmem>>, vector<4x128xf32>,
    %c0_25 = arith.constant 0 : index
    %c3 = arith.constant 3 : index
    %28 = vector.load %arg8[%c0_25, %c3] : memref<4x256xf32, #tpu.memory_space<vmem>>, vector<4x128xf32>
    %c12 = arith.constant 12 : index
    %c0_26 = arith.constant 0 : index
    %29 = vector.load %arg9[%c12, %c0_26] : memref<68x128xf32, #tpu.memory_space<vmem>>, vector<4x128xf32>
    tpu.vector_store %arg9[%c12, %c0_26], %28 {strides = array<i32>} : memref<68x128xf32, #tpu.memory_space<vmem>>, vector<4x128xf32>,
    %c0_27 = arith.constant 0 : index
    %c4_28 = arith.constant 4 : index
    %30 = vector.load %arg8[%c0_27, %c4_28] : memref<4x256xf32, #tpu.memory_space<vmem>>, vector<4x128xf32>
    %c16 = arith.constant 16 : index
    %c0_29 = arith.constant 0 : index
    %31 = vector.load %arg9[%c16, %c0_29] : memref<68x128xf32, #tpu.memory_space<vmem>>, vector<4x128xf32>
    tpu.vector_store %arg9[%c16, %c0_29], %30 {strides = array<i32>} : memref<68x128xf32, #tpu.memory_space<vmem>>, vector<4x128xf32>,
    %c0_30 = arith.constant 0 : index
    %c5 = arith.constant 5 : index
    %32 = vector.load %arg8[%c0_30, %c5] : memref<4x256xf32, #tpu.memory_space<vmem>>, vector<4x128xf32>
    %c20 = arith.constant 20 : index
    %c0_31 = arith.constant 0 : index
    %33 = vector.load %arg9[%c20, %c0_31] : memref<68x128xf32, #tpu.memory_space<vmem>>, vector<4x128xf32>
    tpu.vector_store %arg9[%c20, %c0_31], %32 {strides = array<i32>} : memref<68x128xf32, #tpu.memory_space<vmem>>, vector<4x128xf32>,
    %c0_32 = arith.constant 0 : index
    %c6 = arith.constant 6 : index
    %34 = vector.load %arg8[%c0_32, %c6] : memref<4x256xf32, #tpu.memory_space<vmem>>, vector<4x128xf32>
    %c24 = arith.constant 24 : index
    %c0_33 = arith.constant 0 : index
    %35 = vector.load %arg9[%c24, %c0_33] : memref<68x128xf32, #tpu.memory_space<vmem>>, vector<4x128xf32>
    tpu.vector_store %arg9[%c24, %c0_33], %34 {strides = array<i32>} : memref<68x128xf32, #tpu.memory_space<vmem>>, vector<4x128xf32>,
    %c0_34 = arith.constant 0 : index
    %c7 = arith.constant 7 : index
    %36 = vector.load %arg8[%c0_34, %c7] : memref<4x256xf32, #tpu.memory_space<vmem>>, vector<4x128xf32>
    %c28 = arith.constant 28 : index
    %c0_35 = arith.constant 0 : index
    %37 = vector.load %arg9[%c28, %c0_35] : memref<68x128xf32, #tpu.memory_space<vmem>>, vector<4x128xf32>
    tpu.vector_store %arg9[%c28, %c0_35], %36 {strides = array<i32>} : memref<68x128xf32, #tpu.memory_space<vmem>>, vector<4x128xf32>,
    %c0_36 = arith.constant 0 : index
    %c8_37 = arith.constant 8 : index
    %38 = vector.load %arg8[%c0_36, %c8_37] : memref<4x256xf32, #tpu.memory_space<vmem>>, vector<4x128xf32>
    %c32 = arith.constant 32 : index
    %c0_38 = arith.constant 0 : index
    %39 = vector.load %arg9[%c32, %c0_38] : memref<68x128xf32, #tpu.memory_space<vmem>>, vector<4x128xf32>
    tpu.vector_store %arg9[%c32, %c0_38], %38 {strides = array<i32>} : memref<68x128xf32, #tpu.memory_space<vmem>>, vector<4x128xf32>,
    %c0_39 = arith.constant 0 : index
    %c9 = arith.constant 9 : index
    %40 = vector.load %arg8[%c0_39, %c9] : memref<4x256xf32, #tpu.memory_space<vmem>>, vector<4x128xf32>
    %c36 = arith.constant 36 : index
    %c0_40 = arith.constant 0 : index
    %41 = vector.load %arg9[%c36, %c0_40] : memref<68x128xf32, #tpu.memory_space<vmem>>, vector<4x128xf32>
    tpu.vector_store %arg9[%c36, %c0_40], %40 {strides = array<i32>} : memref<68x128xf32, #tpu.memory_space<vmem>>, vector<4x128xf32>,
    %c0_41 = arith.constant 0 : index
    %c10 = arith.constant 10 : index
    %42 = vector.load %arg8[%c0_41, %c10] : memref<4x256xf32, #tpu.memory_space<vmem>>, vector<4x128xf32>
    %c40 = arith.constant 40 : index
    %c0_42 = arith.constant 0 : index
    %43 = vector.load %arg9[%c40, %c0_42] : memref<68x128xf32, #tpu.memory_space<vmem>>, vector<4x128xf32>
    tpu.vector_store %arg9[%c40, %c0_42], %42 {strides = array<i32>} : memref<68x128xf32, #tpu.memory_space<vmem>>, vector<4x128xf32>,
    %c0_43 = arith.constant 0 : index
    %c11 = arith.constant 11 : index
    %44 = vector.load %arg8[%c0_43, %c11] : memref<4x256xf32, #tpu.memory_space<vmem>>, vector<4x128xf32>
    %c44 = arith.constant 44 : index
    %c0_44 = arith.constant 0 : index
    %45 = vector.load %arg9[%c44, %c0_44] : memref<68x128xf32, #tpu.memory_space<vmem>>, vector<4x128xf32>
    tpu.vector_store %arg9[%c44, %c0_44], %44 {strides = array<i32>} : memref<68x128xf32, #tpu.memory_space<vmem>>, vector<4x128xf32>,
    %c0_45 = arith.constant 0 : index
    %c12_46 = arith.constant 12 : index
    %46 = vector.load %arg8[%c0_45, %c12_46] : memref<4x256xf32, #tpu.memory_space<vmem>>, vector<4x128xf32>
    %c48 = arith.constant 48 : index
    %c0_47 = arith.constant 0 : index
    %47 = vector.load %arg9[%c48, %c0_47] : memref<68x128xf32, #tpu.memory_space<vmem>>, vector<4x128xf32>
    tpu.vector_store %arg9[%c48, %c0_47], %46 {strides = array<i32>} : memref<68x128xf32, #tpu.memory_space<vmem>>, vector<4x128xf32>,
    %c0_48 = arith.constant 0 : index
    %c13 = arith.constant 13 : index
    %48 = vector.load %arg8[%c0_48, %c13] : memref<4x256xf32, #tpu.memory_space<vmem>>, vector<4x128xf32>
    %c52 = arith.constant 52 : index
    %c0_49 = arith.constant 0 : index
    %49 = vector.load %arg9[%c52, %c0_49] : memref<68x128xf32, #tpu.memory_space<vmem>>, vector<4x128xf32>
    tpu.vector_store %arg9[%c52, %c0_49], %48 {strides = array<i32>} : memref<68x128xf32, #tpu.memory_space<vmem>>, vector<4x128xf32>,
    %c0_50 = arith.constant 0 : index
    %c14 = arith.constant 14 : index
    %50 = vector.load %arg8[%c0_50, %c14] : memref<4x256xf32, #tpu.memory_space<vmem>>, vector<4x128xf32>
    %c56 = arith.constant 56 : index
    %c0_51 = arith.constant 0 : index
    %51 = vector.load %arg9[%c56, %c0_51] : memref<68x128xf32, #tpu.memory_space<vmem>>, vector<4x128xf32>
    tpu.vector_store %arg9[%c56, %c0_51], %50 {strides = array<i32>} : memref<68x128xf32, #tpu.memory_space<vmem>>, vector<4x128xf32>,
    %c0_52 = arith.constant 0 : index
    %c15 = arith.constant 15 : index
    %52 = vector.load %arg8[%c0_52, %c15] : memref<4x256xf32, #tpu.memory_space<vmem>>, vector<4x128xf32>
    %c60 = arith.constant 60 : index
    %c0_53 = arith.constant 0 : index
    %53 = vector.load %arg9[%c60, %c0_53] : memref<68x128xf32, #tpu.memory_space<vmem>>, vector<4x128xf32>
    tpu.vector_store %arg9[%c60, %c0_53], %52 {strides = array<i32>} : memref<68x128xf32, #tpu.memory_space<vmem>>, vector<4x128xf32>,
    %c0_54 = arith.constant 0 : index
    %c16_55 = arith.constant 16 : index
    %54 = vector.load %arg8[%c0_54, %c16_55] : memref<4x256xf32, #tpu.memory_space<vmem>>, vector<4x128xf32>
    %c64 = arith.constant 64 : index
    %c0_56 = arith.constant 0 : index
    %55 = vector.load %arg9[%c64, %c0_56] : memref<68x128xf32, #tpu.memory_space<vmem>>, vector<4x128xf32>
    tpu.vector_store %arg9[%c64, %c0_56], %54 {strides = array<i32>} : memref<68x128xf32, #tpu.memory_space<vmem>>, vector<4x128xf32>,
    %c0_57 = arith.constant 0 : index
    %c0_58 = arith.constant 0 : index
    %56 = vector.load %arg6[%c0_57, %c0_58] : memref<8x68xf32, #tpu.memory_space<vmem>>, vector<8x68xf32>
    %c0_59 = arith.constant 0 : index
    %c0_60 = arith.constant 0 : index
    %57 = vector.load %arg9[%c0_59, %c0_60] : memref<68x128xf32, #tpu.memory_space<vmem>>, vector<68x128xf32>
    %cst_61 = arith.constant dense<0.000000e+00> : vector<8x128xf32>
    %58 = tpu.matmul %56, %57, %cst_61 {dimension_numbers = #tpu.dot_dimension_numbers<[1], [0], [0], [1], [0, 0, 1, 1], [], []>} : vector<8x68xf32>, vector<68x128xf32>, vector<8x128xf32> -> vector<8x128xf32>
    %c0_62 = arith.constant 0 : index
    %c0_63 = arith.constant 0 : index
    %c0_64 = arith.constant 0 : index
    %59 = vector.load %arg7[%c0_62, %c0_63, %c0_64] : memref<1x8x128xf32, #tpu.memory_space<vmem>>, vector<1x8x128xf32>
    %60 = vector.shape_cast %59 : vector<1x8x128xf32> to vector<8x128xf32>
    %61 = vector.shape_cast %58 : vector<8x128xf32> to vector<1x8x128xf32>
    tpu.vector_store %arg7[%c0_62, %c0_63, %c0_64], %61 {strides = array<i32>} : memref<1x8x128xf32, #tpu.memory_space<vmem>>, vector<1x8x128xf32>,
    return
  }
  func.func @transform_0(%arg0: i32, %arg1: i32) -> (i32, i32, i32) {
    %c0_i32 = arith.constant 0 : i32
    %c0_i32_0 = arith.constant 0 : i32
    return %arg0, %c0_i32, %arg1 : i32, i32, i32
  }
  func.func @transform_1(%arg0: i32, %arg1: i32) -> (i32, i32, i32) {
    %c1_i32 = arith.constant 1 : i32
    %0 = arith.addi %arg1, %c1_i32 : i32
    %c1_i32_0 = arith.constant 1 : i32
    %1 = arith.muli %0, %c1_i32_0 : i32
    %c0_i32 = arith.constant 0 : i32
    %c0_i32_1 = arith.constant 0 : i32
    return %arg0, %c0_i32, %1 : i32, i32, i32
  }
  func.func @transform_2(%arg0: i32, %arg1: i32) -> (i32, i32, i32) {
    %c0_i32 = arith.constant 0 : i32
    %c0_i32_0 = arith.constant 0 : i32
    return %arg0, %c0_i32, %arg1 : i32, i32, i32
  }
  func.func @transform_3(%arg0: i32, %arg1: i32) -> (i32, i32, i32) {
    %c1_i32 = arith.constant 1 : i32
    %0 = arith.addi %arg1, %c1_i32 : i32
    %c1_i32_0 = arith.constant 1 : i32
    %1 = arith.muli %0, %c1_i32_0 : i32
    %c0_i32 = arith.constant 0 : i32
    %c0_i32_1 = arith.constant 0 : i32
    return %arg0, %c0_i32, %1 : i32, i32, i32
  }
  func.func @transform_4(%arg0: i32, %arg1: i32) -> (i32, i32) {
    %c0_i32 = arith.constant 0 : i32
    %c0_i32_0 = arith.constant 0 : i32
    %c0_i32_1 = arith.constant 0 : i32
    return %c0_i32, %c0_i32_0 : i32, i32
  }
  func.func @transform_5(%arg0: i32, %arg1: i32) -> (i32, i32, i32) {
    %c0_i32 = arith.constant 0 : i32
    %c0_i32_0 = arith.constant 0 : i32
    return %arg0, %c0_i32, %arg1 : i32, i32, i32
  }
}

</mosaic_0001>

<llo_original>
// kernel: tpu_custom_call.1
$region0: #{tpu_custom_call.1}
  #allocation0 [shape = 'u32[]', space=smem, size = 0x4, offset = 0x4, fixed_abs, tag = 'smem constant byte address 0x4 - core index']
  #allocation1 [shape = 'u32[144,128]{1,0:T(1,128)}', space=vmem, size = 0x12000, scoped, tag = 'internal scratch']
  #allocation2 [shape = 'f32[4,256]{1,0:T(4,128)}', space=vmem, size = 0x1000, scoped, tag = 'scratch operand']
  #allocation3 [shape = 'f32[68,128]{1,0:T(8,128)}', space=vmem, size = 0x9000, scoped, tag = 'scratch operand']
  %s0 = inlined_call_operand.hbm [shape: f32[2,4,256], index: 0, kind: input, shape index: {}]
  %s1 = inlined_call_operand.hbm [shape: f32[2,4,256], index: 1, kind: input, shape index: {}]
  %s2 = inlined_call_operand.vmem [shape: f32[2,1,256], index: 2, kind: input, shape index: {}]
  %s3 = inlined_call_operand.hbm [shape: f32[2,1,256], index: 3, kind: input, shape index: {}]
  %s4 = inlined_call_operand.vmem [shape: f32[8,68], index: 4, kind: input, shape index: {}]
  %s5 = inlined_call_operand.hbm [shape: f32[2,8,16], index: 5, kind: output, shape index: {}]
  %s6 = sld [smem:[#allocation0]]
  $region65: #{tpu_custom_call.1} parent=0
    _
  %s8 = ssub.s32 1, %s6
  %s9 = scalar_select 0, %s8, %s6
  $region1: #{tpu_custom_call.1} parent=0
    #allocation4 [shape = 'u8[4096]{0}', space=vmem, size = 0x1000, scoped, tag = 'input window, operand 0']
    #allocation5 [shape = 's32[2]{0}', space=sflag, size = 0x8, scoped, tag = 'scoped memory for tpu_custom_call.1']
    #allocation6 [shape = 's32[2]{0}', space=sflag, size = 0x8, scoped, tag = 'scoped memory for tpu_custom_call.1']
    #allocation7 [shape = 'u8[4096]{0}', space=vmem, size = 0x1000, scoped, tag = 'input window, operand 1']
    #allocation8 [shape = 's32[2]{0}', space=sflag, size = 0x8, scoped, tag = 'scoped memory for tpu_custom_call.1']
    #allocation9 [shape = 'u8[1024]{0}', space=vmem, size = 0x400, scoped, tag = 'input window, operand 3']
    #allocation10 [shape = 'u8[8192]{0}', space=vmem, size = 0x2000, scoped, tag = 'output window, operand 0']
    %10 = vsyncpa [#allocation5], 0
    %s11 = scalar_lea.sflag [#allocation5], 1
    %12 = vsyncpa %s11, 0
    %13 = vsyncpa [#allocation8], 0
    %s14 = scalar_lea.sflag [#allocation8], 1
    %15 = vsyncpa %s14, 0
    %16 = vsyncpa [#allocation6], 0
    %s17 = scalar_lea.sflag [#allocation6], 1
    %18 = vsyncpa %s17, 0
    loop: start=0, step=1, limit=4
    $region2: #{tpu_custom_call.1} parent=1 // loop_pre_header
      _
    $region3: #{tpu_custom_call.1} parent=1 // loop_header
      %s20 = sphi 0, %s24
      %p21 = scmp.ge.s32.totalorder %s20, 4
      %s27 = sphi 0, %s39
      %s28 = sphi 0, %s35
      %s29 = sphi 0, %s27
      %s30 = sphi 0, %s28
      %s31 = sphi 0, %s29
      %s32 = sphi 0, %s30
      %s44 = sphi 0, %s46
      %s47 = sphi 0, %s44
      %s48 = sphi 0, %s47
      %s64 = sphi 0, %s48
      %s74 = sphi 0, %s76
      %s77 = sphi 0, %s74
      %s78 = sphi 0, %s77
      %s94 = sphi 0, %s78
      %s102 = sphi 0, %s104
      %s105 = sphi 0, %s102
      %s106 = sphi 0, %s105
      %s122 = sphi 0, %s106
      %s132 = sphi 0, %s134
      %s135 = sphi 0, %s132
      %s136 = sphi 0, %s135
      %s152 = sphi 0, %s136
      %s156 = sphi 0, %s156
      %s158 = sphi 0, %s156
      %s159 = sphi 0, %s158
      %s173 = sphi 0, %s159
      %s181 = sphi 0, %s183
      %s184 = sphi 0, %s181
      %s185 = sphi 0, %s184
      %s201 = sphi 0, %s185
    $region4: #{tpu_custom_call.1} parent=1 // loop_header_branch
      %23 = sbr.rel (%p21) target = $region8
    $region5: #{tpu_custom_call.1} parent=1 // loop_body
      %s25 = ssub.s32 %s20, 1
      %s26 = ssub.s32 %s20, 2
      %s33 = sadd.s32 1, %s28
      %p34 = scmp.ge.s32.totalorder %s33, 1
      %s35 = scalar_select %p34, 0, %s33
      %s36 = sadd.s32 1, %s27
      %s37 = scalar_select %p34, %s36, %s27
      %p38 = scmp.ge.s32.totalorder %s37, 2
      %s39 = scalar_select %p38, 0, %s37
      %s40 = ssub.s32 %s27, %s39
      %s41 = ssub.s32 %s28, %s35
      %s42 = sor.u32 %s40, %s41
      %p43 = scmp.eq.s32.totalorder %s42, 0
      %s45 = sadd.s32 %s44, 1
      %s46 = scalar_select %p43, %s44, %s45
      %p49 = pneg %p43
      %p50 = scmp.eq.s32.totalorder %s20, 1
      %p51 = por %p49, %p50
      %p52 = scmp.ne.s32.totalorder %s44, %s47
      %p53 = scmp.eq.s32.totalorder %s20, 0
      %p54 = por %p52, %p53
      %p55 = scmp.ne.s32.totalorder %s44, %s47
      %p56 = scmp.eq.s32.totalorder %s25, 1
      %p57 = por %p55, %p56
      %p58 = scmp.ne.s32.totalorder %s47, %s48
      %p59 = scmp.eq.s32.totalorder %s25, 0
      %p60 = por %p58, %p59
      %p61 = scmp.ne.s32.totalorder %s47, %s48
      %p62 = scmp.eq.s32.totalorder %s26, 1
      %p63 = por %p61, %p62
      %p65 = scmp.ne.s32.totalorder %s48, %s64
      %p66 = scmp.eq.s32.totalorder %s26, 0
      %p67 = por %p65, %p66
      %s68 = sadd.s32 %s28, 1
      %s69 = sadd.s32 %s35, 1
      %s70 = ssub.s32 %s27, %s39
      %s71 = ssub.s32 %s68, %s69
      %s72 = sor.u32 %s70, %s71
      %p73 = scmp.eq.s32.totalorder %s72, 0
      %s75 = sadd.s32 %s74, 1
      %s76 = scalar_select %p73, %s74, %s75
      %p79 = pneg %p73
      %p80 = scmp.eq.s32.totalorder %s20, 1
      %p81 = por %p79, %p80
      %p82 = scmp.ne.s32.totalorder %s74, %s77
      %p83 = scmp.eq.s32.totalorder %s20, 0
      %p84 = por %p82, %p83
      %p85 = scmp.ne.s32.totalorder %s74, %s77
      %p86 = scmp.eq.s32.totalorder %s25, 1
      %p87 = por %p85, %p86
      %p88 = scmp.ne.s32.totalorder %s77, %s78
      %p89 = scmp.eq.s32.totalorder %s25, 0
      %p90 = por %p88, %p89
      %p91 = scmp.ne.s32.totalorder %s77, %s78
      %p92 = scmp.eq.s32.totalorder %s26, 1
      %p93 = por %p91, %p92
      %p95 = scmp.ne.s32.totalorder %s78, %s94
      %p96 = scmp.eq.s32.totalorder %s26, 0
      %p97 = por %p95, %p96
      %s98 = ssub.s32 %s27, %s39
      %s99 = ssub.s32 %s28, %s35
      %s100 = sor.u32 %s98, %s99
      %p101 = scmp.eq.s32.totalorder %s100, 0
      %s103 = sadd.s32 %s102, 1
      %s104 = scalar_select %p101, %s102, %s103
      %p107 = pneg %p101
      %p108 = scmp.eq.s32.totalorder %s20, 1
      %p109 = por %p107, %p108
      %p110 = scmp.ne.s32.totalorder %s102, %s105
      %p111 = scmp.eq.s32.totalorder %s20, 0
      %p112 = por %p110, %p111
      %p113 = scmp.ne.s32.totalorder %s102, %s105
      %p114 = scmp.eq.s32.totalorder %s25, 1
      %p115 = por %p113, %p114
      %p116 = scmp.ne.s32.totalorder %s105, %s106
      %p117 = scmp.eq.s32.totalorder %s25, 0
      %p118 = por %p116, %p117
      %p119 = scmp.ne.s32.totalorder %s105, %s106
      %p120 = scmp.eq.s32.totalorder %s26, 1
      %p121 = por %p119, %p120
      %p123 = scmp.ne.s32.totalorder %s106, %s122
      %p124 = scmp.eq.s32.totalorder %s26, 0
      %p125 = por %p123, %p124
      %s126 = sadd.s32 %s28, 1
      %s127 = sadd.s32 %s35, 1
      %s128 = ssub.s32 %s27, %s39
      %s129 = ssub.s32 %s126, %s127
      %s130 = sor.u32 %s128, %s129
      %p131 = scmp.eq.s32.totalorder %s130, 0
      %s133 = sadd.s32 %s132, 1
      %s134 = scalar_select %p131, %s132, %s133
      %p137 = pneg %p131
      %p138 = scmp.eq.s32.totalorder %s20, 1
      %p139 = por %p137, %p138
      %p140 = scmp.ne.s32.totalorder %s132, %s135
      %p141 = scmp.eq.s32.totalorder %s20, 0
      %p142 = por %p140, %p141
      %p143 = scmp.ne.s32.totalorder %s132, %s135
      %p144 = scmp.eq.s32.totalorder %s25, 1
      %p145 = por %p143, %p144
      %p146 = scmp.ne.s32.totalorder %s135, %s136
      %p147 = scmp.eq.s32.totalorder %s25, 0
      %p148 = por %p146, %p147
      %p149 = scmp.ne.s32.totalorder %s135, %s136
      %p150 = scmp.eq.s32.totalorder %s26, 1
      %p151 = por %p149, %p150
      %p153 = scmp.ne.s32.totalorder %s136, %s152
      %p154 = scmp.eq.s32.totalorder %s26, 0
      %p155 = por %p153, %p154
      %s157 = sadd.s32 %s156, 1
      %p160 = scmp.eq.s32.totalorder %s20, 1
      %p161 = scmp.ne.s32.totalorder %s156, %s158
      %p162 = scmp.eq.s32.totalorder %s20, 0
      %p163 = por %p161, %p162
      %p164 = scmp.ne.s32.totalorder %s156, %s158
      %p165 = scmp.eq.s32.totalorder %s25, 1
      %p166 = por %p164, %p165
      %p167 = scmp.ne.s32.totalorder %s158, %s159
      %p168 = scmp.eq.s32.totalorder %s25, 0
      %p169 = por %p167, %p168
      %p170 = scmp.ne.s32.totalorder %s158, %s159
      %p171 = scmp.eq.s32.totalorder %s26, 1
      %p172 = por %p170, %p171
      %p174 = scmp.ne.s32.totalorder %s159, %s173
      %p175 = scmp.eq.s32.totalorder %s26, 0
      %p176 = por %p174, %p175
      %s177 = ssub.s32 %s27, %s39
      %s178 = ssub.s32 %s28, %s35
      %s179 = sor.u32 %s177, %s178
      %p180 = scmp.eq.s32.totalorder %s179, 0
      %s182 = sadd.s32 %s181, 1
      %s183 = scalar_select %p180, %s181, %s182
      %p186 = pneg %p180
      %p187 = scmp.eq.s32.totalorder %s20, 1
      %p188 = por %p186, %p187
      %p189 = scmp.ne.s32.totalorder %s181, %s184
      %p190 = scmp.eq.s32.totalorder %s20, 0
      %p191 = por %p189, %p190
      %p192 = scmp.ne.s32.totalorder %s181, %s184
      %p193 = scmp.eq.s32.totalorder %s25, 1
      %p194 = por %p192, %p193
      %p195 = scmp.ne.s32.totalorder %s184, %s185
      %p196 = scmp.eq.s32.totalorder %s25, 0
      %p197 = por %p195, %p196
      %p198 = scmp.ne.s32.totalorder %s184, %s185
      %p199 = scmp.eq.s32.totalorder %s26, 1
      %p200 = por %p198, %p199
      %p202 = scmp.ne.s32.totalorder %s185, %s201
      %p203 = scmp.eq.s32.totalorder %s26, 0
      %p204 = por %p202, %p203
      %p205 = scmp.le.s32.totalorder 1, %s20
      %p206 = scmp.lt.s32.totalorder %s20, 3
      %p207 = pnand %p205, %p206
      %p208 = pneg %p207
      // Predicated region
      $region9: #{tpu_custom_call.1} parent=5 // pred_check
        _
      $region10: #{tpu_custom_call.1} parent=5 // pred_check_branch
        %210 = sbr.rel (%p207) target = $region12
      $region11: #{tpu_custom_call.1} parent=5 // pred_region
        %s211 = ssub.s32 %s20, 1
        // Predicated region
        $region13: #{tpu_custom_call.1} parent=11 // pred_check
          %p212 = pneg %p169
        $region14: #{tpu_custom_call.1} parent=11 // pred_check_branch
          %214 = sbr.rel (%p212) target = $region16
        $region15: #{tpu_custom_call.1} parent=11 // pred_region
          _
        $region16: #{tpu_custom_call.1} parent=11 // pred_fallthru
          _
      $region12: #{tpu_custom_call.1} parent=5 // pred_fallthru
        _
      %p215 = scmp.lt.s32.totalorder %s20, 2
      // Predicated region
      $region17: #{tpu_custom_call.1} parent=5 // pred_check
        %p216 = pneg %p215
      $region18: #{tpu_custom_call.1} parent=5 // pred_check_branch
        %218 = sbr.rel (%p216) target = $region20
      $region19: #{tpu_custom_call.1} parent=5 // pred_region
        // Predicated region
        $region21: #{tpu_custom_call.1} parent=19 // pred_check
          %p219 = pneg %p54
        $region22: #{tpu_custom_call.1} parent=19 // pred_check_branch
          %221 = sbr.rel (%p219) target = $region24
        $region23: #{tpu_custom_call.1} parent=19 // pred_region
          %s222 = sand.u32 %s44, 1
          %s223 = scalar_lea.sflag [#allocation5], %s222
          %s224 = sand.u32 %s44, 1
          %s225 = smul.addr %s224, 4
          %s226 = scalar_lea.vmem [#allocation4], %s225
          %s228 = ssub.s32 64, 64
          %229 = vsyncadd %s223, %s228
          %s230 = smul.addr %s27, 2
          %s231 = sadd.s32 %s28, %s230
          %s232 = smul.addr %s231, 64
          %s233 = scalar_lea.hbm %s0, %s232
          %s235 = sshll.u32 %s226, 4
          %s236 = int_to_ptr.vmem [resolvable:$true] %s235
          %238 = dma.hbm_to_vmem [thread:$0]  %s233, 64, %s236, %s223
        $region24: #{tpu_custom_call.1} parent=19 // pred_fallthru
          _
        // Predicated region
        $region25: #{tpu_custom_call.1} parent=19 // pred_check
          %p239 = pneg %p84
        $region26: #{tpu_custom_call.1} parent=19 // pred_check_branch
          %241 = sbr.rel (%p239) target = $region28
        $region27: #{tpu_custom_call.1} parent=19 // pred_region
          %s242 = sand.u32 %s20, 1
          %s243 = scalar_lea.sflag [#allocation8], %s242
          %s244 = sand.u32 %s74, 1
          %s245 = smul.addr %s244, 4
          %s246 = scalar_lea.vmem [#allocation7], %s245
          %s247 = sadd.s32 %s28, 1
          %s249 = ssub.s32 64, 64
          %250 = vsyncadd %s243, %s249
          %s251 = smul.addr %s27, 2
          %s252 = sadd.s32 %s247, %s251
          %s253 = smul.addr %s252, 64
          %s254 = scalar_lea.hbm %s1, %s253
          %s256 = sshll.u32 %s246, 4
          %s257 = int_to_ptr.vmem [resolvable:$true] %s256
          %259 = dma.hbm_to_vmem [thread:$0]  %s254, 64, %s257, %s243
        $region28: #{tpu_custom_call.1} parent=19 // pred_fallthru
          _
        // Predicated region
        $region29: #{tpu_custom_call.1} parent=19 // pred_check
          %p260 = pneg %p112
        $region30: #{tpu_custom_call.1} parent=19 // pred_check_branch
          %262 = sbr.rel (%p260) target = $region32
        $region31: #{tpu_custom_call.1} parent=19 // pred_region
          %p263 = scmp.lt.s32.totalorder %s27, 1
          %s264 = scalar_select %p263, %s27, 1
          %p265 = scmp.lt.s32.totalorder %s28, 1
          %s266 = scalar_select %p265, %s28, 1
          %s267 = smul.addr %s264, 2
          %s268 = sadd.s32 %s266, %s267
          %s269 = scalar_lea.vmem %s2, %s268
        $region32: #{tpu_custom_call.1} parent=19 // pred_fallthru
          _
        // Predicated region
        $region33: #{tpu_custom_call.1} parent=19 // pred_check
          %p270 = pneg %p142
        $region34: #{tpu_custom_call.1} parent=19 // pred_check_branch
          %272 = sbr.rel (%p270) target = $region36
        $region35: #{tpu_custom_call.1} parent=19 // pred_region
          %s273 = sand.u32 %s20, 1
          %s274 = scalar_lea.sflag [#allocation8], %s273
          %s275 = sand.u32 %s132, 1
          %s276 = scalar_lea.vmem [#allocation9], %s275
          %s277 = sadd.s32 %s28, 1
          %s279 = ssub.s32 16, 16
          %280 = vsyncadd %s274, %s279
          %s281 = smul.addr %s27, 2
          %s282 = sadd.s32 %s277, %s281
          %s283 = smul.addr %s282, 16
          %s284 = scalar_lea.hbm %s3, %s283
          %s286 = sshll.u32 %s276, 4
          %s287 = int_to_ptr.vmem [resolvable:$true] %s286
          %289 = dma.hbm_to_vmem [thread:$0]  %s284, 16, %s287, %s274
        $region36: #{tpu_custom_call.1} parent=19 // pred_fallthru
          _
      $region20: #{tpu_custom_call.1} parent=5 // pred_fallthru
        _
      %p290 = scmp.le.s32.totalorder 1, %s20
      %p291 = scmp.lt.s32.totalorder %s20, 3
      %p292 = pnand %p290, %p291
      %p293 = pneg %p292
      // Predicated region
      $region37: #{tpu_custom_call.1} parent=5 // pred_check
        _
      $region38: #{tpu_custom_call.1} parent=5 // pred_check_branch
        %295 = sbr.rel (%p292) target = $region40
      $region39: #{tpu_custom_call.1} parent=5 // pred_region
        %s296 = ssub.s32 %s20, 1
        %s297 = sand.u32 %s47, 1
        %s298 = scalar_lea.sflag [#allocation5], %s297
        %s299 = sand.u32 %s47, 1
        %s300 = smul.addr %s299, 4
        %s301 = scalar_lea.vmem [#allocation4], %s300
        // Predicated region
        $region41: #{tpu_custom_call.1} parent=39 // pred_check
          %p302 = pneg %p60
        $region42: #{tpu_custom_call.1} parent=39 // pred_check_branch
          %304 = sbr.rel (%p302) target = $region44
        $region43: #{tpu_custom_call.1} parent=39 // pred_region
          %305 = dma.done %s298, 64
        $region44: #{tpu_custom_call.1} parent=39 // pred_fallthru
          _
        %s306 = sand.u32 %s25, 1
        %s307 = scalar_lea.sflag [#allocation8], %s306
        %s308 = sand.u32 %s77, 1
        %s309 = smul.addr %s308, 4
        %s310 = scalar_lea.vmem [#allocation7], %s309
        // Predicated region
        $region45: #{tpu_custom_call.1} parent=39 // pred_check
          %p311 = pneg %p90
        $region46: #{tpu_custom_call.1} parent=39 // pred_check_branch
          %313 = sbr.rel (%p311) target = $region48
        $region47: #{tpu_custom_call.1} parent=39 // pred_region
          %314 = dma.done %s307, 64
        $region48: #{tpu_custom_call.1} parent=39 // pred_fallthru
          _
        %s315 = sand.u32 %s25, 1
        %s316 = scalar_lea.sflag [#allocation8], %s315
        %s317 = sand.u32 %s135, 1
        %s318 = scalar_lea.vmem [#allocation9], %s317
        // Predicated region
        $region49: #{tpu_custom_call.1} parent=39 // pred_check
          %p319 = pneg %p148
        $region50: #{tpu_custom_call.1} parent=39 // pred_check_branch
          %321 = sbr.rel (%p319) target = $region52
        $region51: #{tpu_custom_call.1} parent=39 // pred_region
          %322 = dma.done %s316, 16
        $region52: #{tpu_custom_call.1} parent=39 // pred_fallthru
          _
        %s323 = sand.u32 %s47, 1
        %s324 = scalar_lea.sflag [#allocation5], %s323
        %s325 = sand.u32 %s47, 1
        %s326 = smul.addr %s325, 4
        %s327 = scalar_lea.vmem [#allocation4], %s326
        %p328 = pneg %p60
        %p329 = pneg %p57
        %s330 = sand.u32 %s25, 1
        %s331 = scalar_lea.sflag [#allocation8], %s330
        %s332 = sand.u32 %s77, 1
        %s333 = smul.addr %s332, 4
        %s334 = scalar_lea.vmem [#allocation7], %s333
        %p335 = pneg %p90
        %p336 = pneg %p87
        %p337 = scmp.lt.s32.totalorder %s29, 1
        %s338 = scalar_select %p337, %s29, 1
        %p339 = scmp.lt.s32.totalorder %s30, 1
        %s340 = scalar_select %p339, %s30, 1
        %s341 = smul.addr %s338, 2
        %s342 = sadd.s32 %s340, %s341
        %s343 = scalar_lea.vmem %s2, %s342
        %p344 = pneg %p118
        %p345 = pneg %p115
        %s346 = sand.u32 %s25, 1
        %s347 = scalar_lea.sflag [#allocation8], %s346
        %s348 = sand.u32 %s135, 1
        %s349 = scalar_lea.vmem [#allocation9], %s348
        %p350 = pneg %p148
        %p351 = pneg %p145
        %p352 = pneg %p169
        %p353 = pneg %p166
        %p354 = pneg %p197
        %p355 = pneg %p194
        %s356 = sand.u32 %s184, 1
        %s357 = scalar_lea.sflag [#allocation6], %s356
        %s358 = sand.u32 %s184, 1
        %s359 = smul.addr %s358, 8
        %s360 = scalar_lea.vmem [#allocation10], %s359
        %s361 = sadd.s32 %s30, 1
        %p362 = scmp.lt.s32.totalorder %s29, 1
        %s363 = scalar_select %p362, %s29, 1
        %p364 = scmp.lt.s32.totalorder %s30, 1
        %s365 = scalar_select %p364, %s30, 1
        %s366 = smul.addr %s363, 2
        %s367 = sadd.s32 %s365, %s366
        %s368 = scalar_lea.vmem %s2, %s367
        %s369 = sadd.s32 %s30, 1
        %v370 = vld [vmem:[%s301] sm:$0xf]
        %v371 = vld [vmem:[%s310] sm:$0xf]
        %v372 = vld [vmem:[%s368] sm:$0x1]
        %vm373 = vcmp.ne.f32.partialorder %v372, 0.0
        %v374 = vsel %vm373, 1, 0
        %v375 = vlaneseq
        %v376 = vshrl.u32 %v375, 7
        %v377 = vsub.s32 0, %v376
        %v378 = vrot.slane %v374, %v377
        %vm379 = vcmp.eq.s32.totalorder %v378, 1
        %v380 = vsel %vm379, %v370, 0.0
        %v381 = vld [vmem:[%s318] sm:$0x1]
        %vm382 = vcmp.ne.f32.partialorder %v381, 0.0
        %v383 = vsel %vm382, 1, 0
        %v384 = vlaneseq
        %v385 = vshrl.u32 %v384, 7
        %v386 = vsub.s32 0, %v385
        %v387 = vrot.slane %v383, %v386
        %vm388 = vcmp.eq.s32.totalorder %v387, 1
        %v389 = vsel %vm388, %v371, 0.0
        %390 = vst [vmem:[#allocation2] sm:$0xf] %v380
        %391 = vst [vmem:[#allocation2 + $0x4] sm:$0xf] %v389
        %v392 = vld [vmem:[#allocation2] sm:$0xf]
        %393 = vst [vmem:[#allocation3] sm:$0xf] %v392
        %v394 = vld [vmem:[#allocation2] sm:$0xff]
        %v396 = vcombine.high %v394, %v394
        %397 = vrot.lane.b32.xlu0 %v394, 127
        %v398 = vpop.permute.xlu0 %397
        %399 = vrot.lane.b32.xlu0 %v396, 127
        %v400 = vpop.permute.xlu0 %399
        %vm401 = vcmask 1039360
        %v402 = vsel %vm401, %v398, %v400
        %404 = vst [vmem:[#allocation3 + $0x4] sm:$0xf] %v402
        %v405 = vld [vmem:[#allocation2] sm:$0xff]
        %v407 = vcombine.high %v405, %v405
        %408 = vrot.lane.b32.xlu0 %v405, 126
        %v409 = vpop.permute.xlu0 %408
        %410 = vrot.lane.b32.xlu0 %v407, 126
        %v411 = vpop.permute.xlu0 %410
        %vm412 = vcmask 1031168
        %v413 = vsel %vm412, %v409, %v411
        %415 = vst [vmem:[#allocation3 + $0x8] sm:$0xf] %v413
        %v416 = vld [vmem:[#allocation2] sm:$0xff]
        %v418 = vcombine.high %v416, %v416
        %419 = vrot.lane.b32.xlu0 %v416, 125
        %v420 = vpop.permute.xlu0 %419
        %421 = vrot.lane.b32.xlu0 %v418, 125
        %v422 = vpop.permute.xlu0 %421
        %vm423 = vcmask 1022976
        %v424 = vsel %vm423, %v420, %v422
        %426 = vst [vmem:[#allocation3 + $0xc] sm:$0xf] %v424
        %v427 = vld [vmem:[#allocation2] sm:$0xff]
        %v429 = vcombine.high %v427, %v427
        %430 = vrot.lane.b32.xlu0 %v427, 124
        %v431 = vpop.permute.xlu0 %430
        %432 = vrot.lane.b32.xlu0 %v429, 124
        %v433 = vpop.permute.xlu0 %432
        %vm434 = vcmask 1014784
        %v435 = vsel %vm434, %v431, %v433
        %437 = vst [vmem:[#allocation3 + $0x10] sm:$0xf] %v435
        %v438 = vld [vmem:[#allocation2] sm:$0xff]
        %v440 = vcombine.high %v438, %v438
        %441 = vrot.lane.b32.xlu0 %v438, 123
        %v442 = vpop.permute.xlu0 %441
        %443 = vrot.lane.b32.xlu0 %v440, 123
        %v444 = vpop.permute.xlu0 %443
        %vm445 = vcmask 1006592
        %v446 = vsel %vm445, %v442, %v444
        %448 = vst [vmem:[#allocation3 + $0x14] sm:$0xf] %v446
        %v449 = vld [vmem:[#allocation2] sm:$0xff]
        %v451 = vcombine.high %v449, %v449
        %452 = vrot.lane.b32.xlu0 %v449, 122
        %v453 = vpop.permute.xlu0 %452
        %454 = vrot.lane.b32.xlu0 %v451, 122
        %v455 = vpop.permute.xlu0 %454
        %vm456 = vcmask 998400
        %v457 = vsel %vm456, %v453, %v455
        %459 = vst [vmem:[#allocation3 + $0x18] sm:$0xf] %v457
        %v460 = vld [vmem:[#allocation2] sm:$0xff]
        %v462 = vcombine.high %v460, %v460
        %463 = vrot.lane.b32.xlu0 %v460, 121
        %v464 = vpop.permute.xlu0 %463
        %465 = vrot.lane.b32.xlu0 %v462, 121
        %v466 = vpop.permute.xlu0 %465
        %vm467 = vcmask 990208
        %v468 = vsel %vm467, %v464, %v466
        %470 = vst [vmem:[#allocation3 + $0x1c] sm:$0xf] %v468
        %v471 = vld [vmem:[#allocation2] sm:$0xff]
        %v473 = vcombine.high %v471, %v471
        %474 = vrot.lane.b32.xlu0 %v471, 120
        %v475 = vpop.permute.xlu0 %474
        %476 = vrot.lane.b32.xlu0 %v473, 120
        %v477 = vpop.permute.xlu0 %476
        %vm478 = vcmask 982016
        %v479 = vsel %vm478, %v475, %v477
        %481 = vst [vmem:[#allocation3 + $0x20] sm:$0xf] %v479
        %v482 = vld [vmem:[#allocation2] sm:$0xff]
        %v484 = vcombine.high %v482, %v482
        %485 = vrot.lane.b32.xlu0 %v482, 119
        %v486 = vpop.permute.xlu0 %485
        %487 = vrot.lane.b32.xlu0 %v484, 119
        %v488 = vpop.permute.xlu0 %487
        %vm489 = vcmask 973824
        %v490 = vsel %vm489, %v486, %v488
        %492 = vst [vmem:[#allocation3 + $0x24] sm:$0xf] %v490
        %v493 = vld [vmem:[#allocation2] sm:$0xff]
        %v495 = vcombine.high %v493, %v493
        %496 = vrot.lane.b32.xlu0 %v493, 118
        %v497 = vpop.permute.xlu0 %496
        %498 = vrot.lane.b32.xlu0 %v495, 118
        %v499 = vpop.permute.xlu0 %498
        %vm500 = vcmask 965632
        %v501 = vsel %vm500, %v497, %v499
        %503 = vst [vmem:[#allocation3 + $0x28] sm:$0xf] %v501
        %v504 = vld [vmem:[#allocation2] sm:$0xff]
        %v506 = vcombine.high %v504, %v504
        %507 = vrot.lane.b32.xlu0 %v504, 117
        %v508 = vpop.permute.xlu0 %507
        %509 = vrot.lane.b32.xlu0 %v506, 117
        %v510 = vpop.permute.xlu0 %509
        %vm511 = vcmask 957440
        %v512 = vsel %vm511, %v508, %v510
        %514 = vst [vmem:[#allocation3 + $0x2c] sm:$0xf] %v512
        %v515 = vld [vmem:[#allocation2] sm:$0xff]
        %v517 = vcombine.high %v515, %v515
        %518 = vrot.lane.b32.xlu0 %v515, 116
        %v519 = vpop.permute.xlu0 %518
        %520 = vrot.lane.b32.xlu0 %v517, 116
        %v521 = vpop.permute.xlu0 %520
        %vm522 = vcmask 949248
        %v523 = vsel %vm522, %v519, %v521
        %525 = vst [vmem:[#allocation3 + $0x30] sm:$0xf] %v523
        %v526 = vld [vmem:[#allocation2] sm:$0xff]
        %v528 = vcombine.high %v526, %v526
        %529 = vrot.lane.b32.xlu0 %v526, 115
        %v530 = vpop.permute.xlu0 %529
        %531 = vrot.lane.b32.xlu0 %v528, 115
        %v532 = vpop.permute.xlu0 %531
        %vm533 = vcmask 941056
        %v534 = vsel %vm533, %v530, %v532
        %536 = vst [vmem:[#allocation3 + $0x34] sm:$0xf] %v534
        %v537 = vld [vmem:[#allocation2] sm:$0xff]
        %v539 = vcombine.high %v537, %v537
        %540 = vrot.lane.b32.xlu0 %v537, 114
        %v541 = vpop.permute.xlu0 %540
        %542 = vrot.lane.b32.xlu0 %v539, 114
        %v543 = vpop.permute.xlu0 %542
        %vm544 = vcmask 932864
        %v545 = vsel %vm544, %v541, %v543
        %547 = vst [vmem:[#allocation3 + $0x38] sm:$0xf] %v545
        %v548 = vld [vmem:[#allocation2] sm:$0xff]
        %v550 = vcombine.high %v548, %v548
        %551 = vrot.lane.b32.xlu0 %v548, 113
        %v552 = vpop.permute.xlu0 %551
        %553 = vrot.lane.b32.xlu0 %v550, 113
        %v554 = vpop.permute.xlu0 %553
        %vm555 = vcmask 924672
        %v556 = vsel %vm555, %v552, %v554
        %558 = vst [vmem:[#allocation3 + $0x3c] sm:$0xf] %v556
        %v559 = vld [vmem:[#allocation2] sm:$0xff]
        %v561 = vcombine.high %v559, %v559
        %562 = vrot.lane.b32.xlu0 %v559, 112
        %v563 = vpop.permute.xlu0 %562
        %564 = vrot.lane.b32.xlu0 %v561, 112
        %v565 = vpop.permute.xlu0 %564
        %vm566 = vcmask 916480
        %v567 = vsel %vm566, %v563, %v565
        %569 = vst [vmem:[#allocation3 + $0x40] sm:$0xf] %v567
        %v570 = vld [vmem:[%s4] sm:$0xff]
        %v571 = vld [vmem:[#allocation3] sm:$0xff]
        %v572 = vld [vmem:[#allocation3 + $0x8] sm:$0xff]
        %v573 = vld [vmem:[#allocation3 + $0x10] sm:$0xff]
        %v574 = vld [vmem:[#allocation3 + $0x18] sm:$0xff]
        %v575 = vld [vmem:[#allocation3 + $0x20] sm:$0xff]
        %v576 = vld [vmem:[#allocation3 + $0x28] sm:$0xff]
        %v577 = vld [vmem:[#allocation3 + $0x30] sm:$0xff]
        %v578 = vld [vmem:[#allocation3 + $0x38] sm:$0xff]
        %v579 = vld [vmem:[#allocation3 + $0x40] sm:$0xf]
        %vm580 = vcmask 556032
        %v582 = vsel %vm580, %v570, 0
        %vm584 = vcmask 1043456
        %v586 = vsel %vm584, %v579, 0
        %588 = vmatprep.subr.mxu0 0.0
        %589 = vmatpush1.msra.mxu0 %v571
        %590 = vmatprep.subr.mxu0 0.0
        %591 = vmatpush1.msra.mxu0 %v572
        %592 = vmatprep.subr.mxu0 0.0
        %593 = vmatpush1.msra.mxu0 %v573
        %594 = vmatprep.subr.mxu0 0.0
        %595 = vmatpush1.msra.mxu0 %v574
        %596 = vmatprep.subr.mxu0 0.0
        %597 = vmatpush1.msra.mxu0 %v575
        %598 = vmatprep.subr.mxu0 0.0
        %599 = vmatpush1.msra.mxu0 %v576
        %600 = vmatprep.subr.mxu0 0.0
        %601 = vmatpush1.msra.mxu0 %v577
        %602 = vmatprep.subr.mxu0 0.0
        %603 = vmatpush1.msra.mxu0 %v578
        %604 = vmatprep.subr.mxu0 0.0
        %605 = vmatpush1.msra.mxu0 %v586
        %606 = vmatprep.subr.mxu0 0.0
        %607 = vmatpush1.msra.mxu0 0.0
        %608 = vmatprep.subr.mxu0 0.0
        %609 = vmatpush1.msra.mxu0 0.0
        %610 = vmatprep.subr.mxu0 0.0
        %611 = vmatpush1.msra.mxu0 0.0
        %612 = vmatprep.subr.mxu0 0.0
        %613 = vmatpush1.msra.mxu0 0.0
        %614 = vmatprep.subr.mxu0 0.0
        %615 = vmatpush1.msra.mxu0 0.0
        %616 = vmatprep.subr.mxu0 0.0
        %617 = vmatpush1.msra.mxu0 0.0
        %618 = vmatprep.subr.mxu0 0.0
        %619 = vmatpush1.msra.mxu0 0.0
        %620 = vmatprep.subr.mxu0 0.0
        %621 = vmatpush1.msra.mxu0 0.0
        %622 = vmatprep.subr.mxu0 0.0
        %623 = vmatpush1.msra.mxu0 0.0
        %624 = vmatprep.subr.mxu0 0.0
        %625 = vmatpush1.msra.mxu0 0.0
        %626 = vmatprep.subr.mxu0 0.0
        %627 = vmatpush1.msra.mxu0 0.0
        %628 = vmatprep.subr.mxu0 0.0
        %629 = vmatpush1.msra.mxu0 0.0
        %630 = vmatprep.subr.mxu0 0.0
        %631 = vmatpush1.msra.mxu0 0.0
        %632 = vmatprep.subr.mxu0 0.0
        %633 = vmatpush1.msra.mxu0 0.0
        %634 = vmatprep.subr.mxu0 0.0
        %635 = vmatpush1.msra.mxu0 0.0
        %636 = vmatprep.subr.mxu0 0.0
        %637 = vmatpush1.msra.mxu0 0.0
        %638 = vmatprep.subr.mxu0 0.0
        %639 = vmatpush1.msra.mxu0 0.0
        %640 = vmatprep.subr.mxu0 0.0
        %641 = vmatpush1.msra.mxu0 0.0
        %642 = vmatprep.subr.mxu0 0.0
        %643 = vmatpush1.msra.mxu0 0.0
        %644 = vmatprep.subr.mxu0 0.0
        %645 = vmatpush1.msra.mxu0 0.0
        %646 = vmatprep.subr.mxu0 0.0
        %647 = vmatpush1.msra.mxu0 0.0
        %648 = vmatprep.subr.mxu0 0.0
        %649 = vmatpush1.msra.mxu0 0.0
        %650 = vmatprep.subr.mxu0 0.0
        %651 = vmatpush1.msra.mxu0 0.0
        %652 = vmatprep.mubr.f32.mxu0 0.0
        %653 = vmatmul.mubr.f32.gmra.mrb[0].mxu0 %v582
        %v654 = vpop.f32.mrb[0].mxu0
        %v655 = vadd.f32 0.0, %v654
        %v656 = vpop.f32.mrb[0].mxu0
        %657 = vdwg.mxu0
        %658 = vst [vmem:[%s360] sm:$0xff] %v655
        %s659 = sand.u32 %s184, 1
        %s660 = scalar_lea.sflag [#allocation6], %s659
        %s661 = sand.u32 %s184, 1
        %s662 = smul.addr %s661, 8
        %s663 = scalar_lea.vmem [#allocation10], %s662
        // Predicated region
        $region53: #{tpu_custom_call.1} parent=39 // pred_check
          %p664 = pneg %p194
        $region54: #{tpu_custom_call.1} parent=39 // pred_check_branch
          %666 = sbr.rel (%p664) target = $region56
        $region55: #{tpu_custom_call.1} parent=39 // pred_region
          %s668 = ssub.s32 128, 128
          %669 = vsyncadd %s660, %s668
          %s670 = sadd.s32 %s30, %s29
          %s671 = smul.addr %s670, 128
          %s672 = scalar_lea.hbm %s5, %s671
          %s674 = sshll.u32 %s663, 4
          %s675 = int_to_ptr.vmem [resolvable:$true] %s674
          %677 = dma.vmem_to_hbm [thread:$0]  %s675, 128, %s672, %s660
        $region56: #{tpu_custom_call.1} parent=39 // pred_fallthru
          _
      $region40: #{tpu_custom_call.1} parent=5 // pred_fallthru
        _
      %p678 = scmp.le.s32.totalorder 2, %s20
      // Predicated region
      $region57: #{tpu_custom_call.1} parent=5 // pred_check
        %p679 = pneg %p678
      $region58: #{tpu_custom_call.1} parent=5 // pred_check_branch
        %681 = sbr.rel (%p679) target = $region60
      $region59: #{tpu_custom_call.1} parent=5 // pred_region
        %s682 = ssub.s32 %s20, 2
        // Predicated region
        $region61: #{tpu_custom_call.1} parent=59 // pred_check
          %p683 = pneg %p200
        $region62: #{tpu_custom_call.1} parent=59 // pred_check_branch
          %685 = sbr.rel (%p683) target = $region64
        $region63: #{tpu_custom_call.1} parent=59 // pred_region
          %s686 = sand.u32 %s185, 1
          %s687 = scalar_lea.sflag [#allocation6], %s686
          %s688 = sand.u32 %s185, 1
          %s689 = smul.addr %s688, 8
          %s690 = scalar_lea.vmem [#allocation10], %s689
          %691 = dma.done %s687, 128
        $region64: #{tpu_custom_call.1} parent=59 // pred_fallthru
          _
      $region60: #{tpu_custom_call.1} parent=5 // pred_fallthru
        _
    $region6: #{tpu_custom_call.1} parent=1 // loop_footer
      %s24 = sadd.s32 1, %s20
    $region7: #{tpu_custom_call.1} parent=1 // loop_footer_branch
      %19 = sbr.rel target = $region3
    $region8: #{tpu_custom_call.1} parent=1 // loop_exit
      _
    %692 = vsyncpa [#allocation5], 1
    %s693 = scalar_lea.sflag [#allocation5], 1
    %694 = vsyncpa %s693, 1
    %695 = vsyncpa [#allocation8], 1
    %s696 = scalar_lea.sflag [#allocation8], 1
    %697 = vsyncpa %s696, 1
    %698 = vsyncpa [#allocation6], 1
    %s699 = scalar_lea.sflag [#allocation6], 1
    %700 = vsyncpa %s699, 1

</llo_original>
